<compile_context>
chip_gen: v5e
topology: v5e:2x2
jax: 0.10.0
libtpu: 0.0.40
codegen_flags: <defaults>
</compile_context>

<pallas_src>
import functools

import numpy as np
import jax
import jax.numpy as jnp
from jax.experimental import pallas as pl
from jax.experimental.pallas import tpu as pltpu


def _dino_loss_kernel(student_ref, teacher_ref, center_ref,       # inputs
                      loss_ref, new_center_ref,                   # outputs
                      q_sc, qsum_sc, acc_sc,                      # scratch
                      *, ncrops, batch,
                      inv_teacher_temp, inv_student_temp,
                      center_momentum, loss_scale):
    v = pl.program_id(0)          # which student crop this grid step handles

    # ------- step 0: teacher softmax (resident), loss acc init, center EMA -------
    @pl.when(v == 0)
    def _init():
        t = teacher_ref[...].astype(jnp.float32)                  # (2B, D)
        c = center_ref[...].astype(jnp.float32)                   # (1, D)

        tl = (t - c) * inv_teacher_temp
        tl = tl - jnp.max(tl, axis=-1, keepdims=True)
        te = jnp.exp(tl)
        row_sum = jnp.sum(te, axis=-1, keepdims=True)             # (2B, 1)
        q = te * pl.reciprocal(row_sum, approx=True)              # (2B, D)
        q_sc[...] = q
        qsum_sc[...] = q[0:batch, :] + q[batch:2 * batch, :]      # q0 + q1, (B, D)

        acc_sc[...] = jnp.zeros_like(acc_sc)

        # center EMA update (single device => world_size == 1)
        batch_center = jnp.sum(t, axis=0, keepdims=True) * (1.0 / (2 * batch))
        new_center_ref[...] = (c * center_momentum
                               + batch_center * (1.0 - center_momentum))

    # ------- per-crop student log_softmax -------
    s = student_ref[...].astype(jnp.float32) * inv_student_temp   # (B, D)
    sm = s - jnp.max(s, axis=-1, keepdims=True)
    lse = jnp.log(jnp.sum(jnp.exp(sm), axis=-1, keepdims=True))
    logp = sm - lse                                               # (B, D)

    # ------- separable cross-view CE accumulation -------
    # full term: -(q0+q1).logp_v for every crop v ...
    acc_sc[...] += -jnp.sum(qsum_sc[...] * logp, keepdims=True)

    # ... then add back the excluded diagonal terms (v == iq) for v in {0, 1}.
    @pl.when(v == 0)
    def _corr0():
        acc_sc[...] += jnp.sum(q_sc[0:batch, :] * logp, keepdims=True)

    @pl.when(v == 1)
    def _corr1():
        acc_sc[...] += jnp.sum(q_sc[batch:2 * batch, :] * logp, keepdims=True)

    # ------- finalize: single scalar scale (1 / (batch * n_terms)) -------
    @pl.when(v == ncrops - 1)
    def _final():
        loss_ref[...] = acc_sc[...] * loss_scale


@functools.lru_cache(maxsize=None)
def _build_dino_loss_fn(ncrops, batch, out_dim, in_dtype_str,
                        temp, student_temp, center_momentum):
    """Build (and cache) a jitted pallas-backed DINO loss for a fixed config."""
    itemsize = jnp.dtype(in_dtype_str).itemsize
    n_terms = sum(1 for v in range(ncrops) for iq in range(2) if v != iq)

    kernel = functools.partial(
        _dino_loss_kernel,
        ncrops=ncrops, batch=batch,
        inv_teacher_temp=float(1.0 / temp),
        inv_student_temp=float(1.0 / student_temp),
        center_momentum=float(center_momentum),
        loss_scale=float(1.0 / (batch * n_terms)))

    # Rough VMEM budget: double-buffered student crop + resident teacher/center +
    # f32 softmax scratch + outputs, with 2x headroom (clamped for v7x's 64 MiB).
    est = (2 * batch * out_dim * itemsize            # student crop, double-buffered
           + 2 * 2 * batch * out_dim * itemsize      # teacher (resident) buffers
           + 2 * out_dim * 4                         # center in
           + 3 * batch * out_dim * 4                 # q + qsum scratch (f32)
           + 2 * out_dim * 4 + 4096)                 # new_center out + misc
    vmem_limit = int(min(max(2 * est, 4 * 1024 * 1024), 64 * 1024 * 1024))

    grid_spec = pltpu.PrefetchScalarGridSpec(
        num_scalar_prefetch=0,
        grid=(ncrops,),
        in_specs=[
            pl.BlockSpec((batch, out_dim), lambda v: (v, 0)),        # student crop v
            pl.BlockSpec((2 * batch, out_dim), lambda v: (0, 0)),    # teacher (resident)
            pl.BlockSpec((1, out_dim), lambda v: (0, 0)),            # center (resident)
        ],
        out_specs=(
            pl.BlockSpec((1, 1), lambda v: (0, 0)),                  # scalar loss
            pl.BlockSpec((1, out_dim), lambda v: (0, 0)),            # new center
        ),
        scratch_shapes=[
            pltpu.VMEM((2 * batch, out_dim), jnp.float32),   # teacher softmax q
            pltpu.VMEM((batch, out_dim), jnp.float32),       # q0 + q1
            pltpu.VMEM((1, 1), jnp.float32),                 # loss accumulator
        ])

    call = pl.pallas_call(
        kernel,
        out_shape=(jax.ShapeDtypeStruct((1, 1), jnp.float32),
                   jax.ShapeDtypeStruct((1, out_dim), jnp.float32)),
        grid_spec=grid_spec,
        compiler_params=pltpu.CompilerParams(
            dimension_semantics=("arbitrary",),      # sequential accumulator axis
            vmem_limit_bytes=vmem_limit))

    @jax.jit
    def run(student_output, teacher_output, center):
        loss, new_center = call(student_output, teacher_output, center)
        return loss[0, 0], new_center

    return run


class DINOLossPallas:
    """JAX/Pallas port of DINOLoss. State (center) is carried functionally."""

    def __init__(self, out_dim, ncrops, warmup_teacher_temp, teacher_temp,
                 warmup_teacher_temp_epochs, nepochs,
                 student_temp=0.1, center_momentum=0.9):
        self.out_dim = out_dim
        self.ncrops = ncrops
        self.student_temp = student_temp
        self.center_momentum = center_momentum
        self.center = jnp.zeros((1, out_dim), jnp.float32)
        self.teacher_temp_schedule = np.concatenate((
            np.linspace(warmup_teacher_temp, teacher_temp, warmup_teacher_temp_epochs),
            np.ones(nepochs - warmup_teacher_temp_epochs) * teacher_temp))

    def __call__(self, student_output, teacher_output, label, epoch):
        # `label` is unused by the reference forward (ce_loss is never invoked).
        two_b, out_dim = teacher_output.shape
        batch = two_b // 2
        assert student_output.shape == (self.ncrops * batch, out_dim)

        temp = float(self.teacher_temp_schedule[epoch])
        fn = _build_dino_loss_fn(self.ncrops, batch, out_dim,
                                 str(student_output.dtype),
                                 temp, float(self.student_temp),
                                 float(self.center_momentum))

        loss, new_center = fn(student_output, teacher_output, self.center)
        self.center = new_center   # update_center (no_grad in torch) -> functional update
        return loss


def _reference_dino_loss(student, teacher, center, temp, ncrops,
                         student_temp, center_momentum):
    """Pure-JAX reference mirroring the PyTorch forward (single device)."""
    student = student.astype(jnp.float32)
    teacher = teacher.astype(jnp.float32)
    center = center.astype(jnp.float32)
    batch = teacher.shape[0] // 2
    student_out = student / student_temp
    student_chunks = jnp.split(student_out, ncrops, axis=0)
    teacher_out = jax.nn.softmax((teacher - center) / temp, axis=-1)
    teacher_chunks = jnp.split(teacher_out, 2, axis=0)
    total, n = 0.0, 0
    for v in range(ncrops):
        for iq, q in enumerate(teacher_chunks):
            if v == iq:
                continue
            loss = jnp.sum(-q * jax.nn.log_softmax(student_chunks[v], axis=-1), axis=-1)
            total = total + jnp.mean(loss)
            n += 1
    total = total / n
    batch_center = jnp.sum(teacher, axis=0, keepdims=True) / (2 * batch)
    new_center = center * center_momentum + batch_center * (1 - center_momentum)
    return total, new_center


if __name__ == "__main__":
    # Small, TPU-friendly shapes consistent with DINOLoss:
    #   out_dim = 128 (lane-aligned), per-crop batch B = 16 (bf16 sublane-aligned),
    #   ncrops = 4.  Inputs are bf16 (as produced by a bf16 DINO head).
    out_dim, batch, ncrops = 128, 16, 4
    nepochs, warmup_epochs = 10, 3
    epoch = 1

    key = jax.random.PRNGKey(0)
    k_s, k_t = jax.random.split(key)
    student_output = jax.random.normal(
        k_s, (ncrops * batch, out_dim), jnp.float32).astype(jnp.bfloat16)
    teacher_output = jax.random.normal(
        k_t, (2 * batch, out_dim), jnp.float32).astype(jnp.bfloat16)
    label = jnp.zeros((2 * batch,), jnp.int32)   # unused by forward, kept for parity

    dino = DINOLossPallas(out_dim=out_dim, ncrops=ncrops,
                          warmup_teacher_temp=0.04, teacher_temp=0.07,
                          warmup_teacher_temp_epochs=warmup_epochs, nepochs=nepochs)
    center0 = dino.center

    loss = dino(student_output, teacher_output, label, epoch)
    loss = jax.block_until_ready(loss)
    new_center = jax.block_until_ready(dino.center)

    # Verify against pure-JAX reference (same bf16 inputs, f32 math).
    temp = float(dino.teacher_temp_schedule[epoch])
    ref_loss, ref_center = _reference_dino_loss(
        student_output, teacher_output, center0, temp, ncrops,
        dino.student_temp, dino.center_momentum)
    # Slightly loosened tolerance for the approximate-reciprocal softmax denominator.
    np.testing.assert_allclose(np.asarray(loss), np.asarray(ref_loss),
                               rtol=2e-3, atol=2e-3)
    np.testing.assert_allclose(np.asarray(new_center), np.asarray(ref_center),
                               rtol=1e-5, atol=1e-5)

    print("KERNEL_OK")
</pallas_src>

<mosaic_0001>
module attributes {stable_mosaic.version = 11 : i64} {
  func.func @_dino_loss_kernel(%arg0: i32, %arg1: memref<16x128xbf16, #tpu.memory_space<vmem>>, %arg2: memref<32x128xbf16, #tpu.memory_space<vmem>>, %arg3: memref<1x128xf32, #tpu.memory_space<vmem>>, %arg4: memref<1x1xf32, #tpu.memory_space<vmem>>, %arg5: memref<1x128xf32, #tpu.memory_space<vmem>>, %arg6: memref<32x128xf32, #tpu.memory_space<vmem>>, %arg7: memref<16x128xf32, #tpu.memory_space<vmem>>, %arg8: memref<1x1xf32, #tpu.memory_space<vmem>>) attributes {dimension_semantics = [#tpu.dimension_semantics<arbitrary>], iteration_bounds = array<i64: 4>, scalar_prefetch = 0 : i64, scratch_operands = 3 : i64, tpu.core_type = #tpu.core_type<tc>, window_params = [{transform_indices = @transform_0, window_bounds = array<i64: 16, 128>}, {pipeline_mode = #tpu.pipeline_mode<synchronous>, transform_indices = @transform_1, window_bounds = array<i64: 32, 128>}, {pipeline_mode = #tpu.pipeline_mode<synchronous>, transform_indices = @transform_2, window_bounds = array<i64: 1, 128>}, {pipeline_mode = #tpu.pipeline_mode<synchronous>, transform_indices = @transform_3, window_bounds = array<i64: 1, 1>}, {pipeline_mode = #tpu.pipeline_mode<synchronous>, transform_indices = @transform_4, window_bounds = array<i64: 1, 128>}]} {
    %c0_i32 = arith.constant 0 : i32
    %0 = arith.cmpi eq, %arg0, %c0_i32 : i32
    %1 = arith.extui %0 : i1 to i32
    %c0_i32_0 = arith.constant 0 : i32
    %2 = arith.cmpi ne, %1, %c0_i32_0 : i32
    scf.if %2 {
      %c0_16 = arith.constant 0 : index
      %c0_17 = arith.constant 0 : index
      %38 = vector.load %arg2[%c0_16, %c0_17] : memref<32x128xbf16, #tpu.memory_space<vmem>>, vector<32x128xbf16>
      %39 = arith.extf %38 : vector<32x128xbf16> to vector<32x128xf32>
      %c0_18 = arith.constant 0 : index
      %c0_19 = arith.constant 0 : index
      %40 = vector.load %arg3[%c0_18, %c0_19] : memref<1x128xf32, #tpu.memory_space<vmem>>, vector<1x128xf32>
      %41 = vector.broadcast %40 : vector<1x128xf32> to vector<32x128xf32>
      %42 = arith.subf %39, %41 : vector<32x128xf32>
      %cst_20 = arith.constant 18.181818 : f32
      %43 = vector.broadcast %cst_20 : f32 to vector<32x128xf32>
      %44 = arith.mulf %42, %43 : vector<32x128xf32>
      %cst_21 = arith.constant dense<0xFF800000> : vector<32xf32>
      %45 = vector.multi_reduction <maximumf>, %44, %cst_21 [1] : vector<32x128xf32> to vector<32xf32>
      %46 = vector.shape_cast %45 : vector<32xf32> to vector<32x1xf32>
      %47 = vector.broadcast %46 : vector<32x1xf32> to vector<32x128xf32>
      %48 = arith.subf %44, %47 : vector<32x128xf32>
      %49 = math.exp %48 : vector<32x128xf32>
      %cst_22 = arith.constant dense<0.000000e+00> : vector<32xf32>
      %50 = vector.multi_reduction <add>, %49, %cst_22 [1] : vector<32x128xf32> to vector<32xf32>
      %51 = vector.shape_cast %50 : vector<32xf32> to vector<32x1xf32>
      %52 = tpu.reciprocal %51 {approx = true} : vector<32x1xf32> -> vector<32x1xf32>
      %53 = vector.broadcast %52 : vector<32x1xf32> to vector<32x128xf32>
      %54 = arith.mulf %49, %53 : vector<32x128xf32>
      %c0_23 = arith.constant 0 : index
      %c0_24 = arith.constant 0 : index
      %55 = vector.load %arg6[%c0_23, %c0_24] : memref<32x128xf32, #tpu.memory_space<vmem>>, vector<32x128xf32>
      tpu.vector_store %arg6[%c0_23, %c0_24], %54 {strides = array<i32>} : memref<32x128xf32, #tpu.memory_space<vmem>>, vector<32x128xf32>,
      %56 = vector.extract_strided_slice %54 {offsets = [0, 0], sizes = [16, 128], strides = [1, 1]} : vector<32x128xf32> to vector<16x128xf32>
      %57 = vector.extract_strided_slice %54 {offsets = [16, 0], sizes = [16, 128], strides = [1, 1]} : vector<32x128xf32> to vector<16x128xf32>
      %58 = arith.addf %56, %57 : vector<16x128xf32>
      %c0_25 = arith.constant 0 : index
      %c0_26 = arith.constant 0 : index
      %59 = vector.load %arg7[%c0_25, %c0_26] : memref<16x128xf32, #tpu.memory_space<vmem>>, vector<16x128xf32>
      tpu.vector_store %arg7[%c0_25, %c0_26], %58 {strides = array<i32>} : memref<16x128xf32, #tpu.memory_space<vmem>>, vector<16x128xf32>,
      %cst_27 = arith.constant 0.000000e+00 : f32
      %60 = vector.broadcast %cst_27 : f32 to vector<1x1xf32>
      %c0_28 = arith.constant 0 : index
      %c0_29 = arith.constant 0 : index
      %61 = vector.load %arg8[%c0_28, %c0_29] : memref<1x1xf32, #tpu.memory_space<vmem>>, vector<1x1xf32>
      tpu.vector_store %arg8[%c0_28, %c0_29], %60 {strides = array<i32>} : memref<1x1xf32, #tpu.memory_space<vmem>>, vector<1x1xf32>,
      %cst_30 = arith.constant dense<0.000000e+00> : vector<128xf32>
      %62 = vector.multi_reduction <add>, %39, %cst_30 [0] : vector<32x128xf32> to vector<128xf32>
      %63 = vector.shape_cast %62 : vector<128xf32> to vector<1x128xf32>
      %cst_31 = arith.constant 3.125000e-02 : f32
      %64 = vector.broadcast %cst_31 : f32 to vector<1x128xf32>
      %65 = arith.mulf %63, %64 : vector<1x128xf32>
      %cst_32 = arith.constant 0.899999976 : f32
      %66 = vector.broadcast %cst_32 : f32 to vector<1x128xf32>
      %67 = arith.mulf %40, %66 : vector<1x128xf32>
      %cst_33 = arith.constant 1.000000e-01 : f32
      %68 = vector.broadcast %cst_33 : f32 to vector<1x128xf32>
      %69 = arith.mulf %65, %68 : vector<1x128xf32>
      %70 = arith.addf %67, %69 : vector<1x128xf32>
      %c0_34 = arith.constant 0 : index
      %c0_35 = arith.constant 0 : index
      %71 = vector.load %arg5[%c0_34, %c0_35] : memref<1x128xf32, #tpu.memory_space<vmem>>, vector<1x128xf32>
      tpu.vector_store %arg5[%c0_34, %c0_35], %70 {strides = array<i32>} : memref<1x128xf32, #tpu.memory_space<vmem>>, vector<1x128xf32>,
    } else {
    }
    %c0 = arith.constant 0 : index
    %c0_1 = arith.constant 0 : index
    %3 = vector.load %arg1[%c0, %c0_1] : memref<16x128xbf16, #tpu.memory_space<vmem>>, vector<16x128xbf16>
    %4 = arith.extf %3 : vector<16x128xbf16> to vector<16x128xf32>
    %cst = arith.constant 1.000000e+01 : f32
    %5 = vector.broadcast %cst : f32 to vector<16x128xf32>
    %6 = arith.mulf %4, %5 : vector<16x128xf32>
    %cst_2 = arith.constant dense<0xFF800000> : vector<16xf32>
    %7 = vector.multi_reduction <maximumf>, %6, %cst_2 [1] : vector<16x128xf32> to vector<16xf32>
    %8 = vector.shape_cast %7 : vector<16xf32> to vector<16x1xf32>
    %9 = vector.broadcast %8 : vector<16x1xf32> to vector<16x128xf32>
    %10 = arith.subf %6, %9 : vector<16x128xf32>
    %11 = math.exp %10 : vector<16x128xf32>
    %cst_3 = arith.constant dense<0.000000e+00> : vector<16xf32>
    %12 = vector.multi_reduction <add>, %11, %cst_3 [1] : vector<16x128xf32> to vector<16xf32>
    %13 = vector.shape_cast %12 : vector<16xf32> to vector<16x1xf32>
    %14 = math.log %13 : vector<16x1xf32>
    %15 = vector.broadcast %14 : vector<16x1xf32> to vector<16x128xf32>
    %16 = arith.subf %10, %15 : vector<16x128xf32>
    %c0_4 = arith.constant 0 : index
    %c0_5 = arith.constant 0 : index
    %17 = vector.load %arg8[%c0_4, %c0_5] : memref<1x1xf32, #tpu.memory_space<vmem>>, vector<1x1xf32>
    %c0_6 = arith.constant 0 : index
    %c0_7 = arith.constant 0 : index
    %18 = vector.load %arg7[%c0_6, %c0_7] : memref<16x128xf32, #tpu.memory_space<vmem>>, vector<16x128xf32>
    %19 = arith.mulf %18, %16 : vector<16x128xf32>
    %20 = vector.shape_cast %19 : vector<16x128xf32> to vector<1x16x128xf32>
    %cst_8 = arith.constant dense<0.000000e+00> : vector<1xf32>
    %21 = vector.multi_reduction <add>, %20, %cst_8 [1, 2] : vector<1x16x128xf32> to vector<1xf32>
    %22 = vector.shape_cast %21 : vector<1xf32> to vector<1x1x1xf32>
    %23 = vector.extract %22[0, 0, 0] : f32 from vector<1x1x1xf32>
    %24 = vector.broadcast %23 : f32 to vector<1x1xf32>
    %cst_9 = arith.constant 0.000000e+00 : f32
    %25 = vector.broadcast %cst_9 : f32 to vector<1x1xf32>
    %26 = arith.subf %25, %24 : vector<1x1xf32>
    %27 = arith.addf %17, %26 : vector<1x1xf32>
    %c0_10 = arith.constant 0 : index
    %c0_11 = arith.constant 0 : index
    %28 = vector.load %arg8[%c0_10, %c0_11] : memref<1x1xf32, #tpu.memory_space<vmem>>, vector<1x1xf32>
    tpu.vector_store %arg8[%c0_10, %c0_11], %27 {strides = array<i32>} : memref<1x1xf32, #tpu.memory_space<vmem>>, vector<1x1xf32>,
    %c0_i32_12 = arith.constant 0 : i32
    %29 = arith.cmpi eq, %arg0, %c0_i32_12 : i32
    %30 = arith.extui %29 : i1 to i32
    %c0_i32_13 = arith.constant 0 : i32
    %31 = arith.cmpi ne, %30, %c0_i32_13 : i32
    scf.if %31 {
      %c0_16 = arith.constant 0 : index
      %c0_17 = arith.constant 0 : index
      %38 = vector.load %arg8[%c0_16, %c0_17] : memref<1x1xf32, #tpu.memory_space<vmem>>, vector<1x1xf32>
      %c0_18 = arith.constant 0 : index
      %c0_19 = arith.constant 0 : index
      %39 = vector.load %arg6[%c0_18, %c0_19] : memref<32x128xf32, #tpu.memory_space<vmem>>, vector<16x128xf32>
      %40 = arith.mulf %39, %16 : vector<16x128xf32>
      %41 = vector.shape_cast %40 : vector<16x128xf32> to vector<1x16x128xf32>
      %cst_20 = arith.constant dense<0.000000e+00> : vector<1xf32>
      %42 = vector.multi_reduction <add>, %41, %cst_20 [1, 2] : vector<1x16x128xf32> to vector<1xf32>
      %43 = vector.shape_cast %42 : vector<1xf32> to vector<1x1x1xf32>
      %44 = vector.extract %43[0, 0, 0] : f32 from vector<1x1x1xf32>
      %45 = vector.broadcast %44 : f32 to vector<1x1xf32>
      %46 = arith.addf %38, %45 : vector<1x1xf32>
      %c0_21 = arith.constant 0 : index
      %c0_22 = arith.constant 0 : index
      %47 = vector.load %arg8[%c0_21, %c0_22] : memref<1x1xf32, #tpu.memory_space<vmem>>, vector<1x1xf32>
      tpu.vector_store %arg8[%c0_21, %c0_22], %46 {strides = array<i32>} : memref<1x1xf32, #tpu.memory_space<vmem>>, vector<1x1xf32>,
    } else {
    }
    %c1_i32 = arith.constant 1 : i32
    %32 = arith.cmpi eq, %arg0, %c1_i32 : i32
    %33 = arith.extui %32 : i1 to i32
    %c0_i32_14 = arith.constant 0 : i32
    %34 = arith.cmpi ne, %33, %c0_i32_14 : i32
    scf.if %34 {
      %c0_16 = arith.constant 0 : index
      %c0_17 = arith.constant 0 : index
      %38 = vector.load %arg8[%c0_16, %c0_17] : memref<1x1xf32, #tpu.memory_space<vmem>>, vector<1x1xf32>
      %c16 = arith.constant 16 : index
      %c0_18 = arith.constant 0 : index
      %39 = vector.load %arg6[%c16, %c0_18] : memref<32x128xf32, #tpu.memory_space<vmem>>, vector<16x128xf32>
      %40 = arith.mulf %39, %16 : vector<16x128xf32>
      %41 = vector.shape_cast %40 : vector<16x128xf32> to vector<1x16x128xf32>
      %cst_19 = arith.constant dense<0.000000e+00> : vector<1xf32>
      %42 = vector.multi_reduction <add>, %41, %cst_19 [1, 2] : vector<1x16x128xf32> to vector<1xf32>
      %43 = vector.shape_cast %42 : vector<1xf32> to vector<1x1x1xf32>
      %44 = vector.extract %43[0, 0, 0] : f32 from vector<1x1x1xf32>
      %45 = vector.broadcast %44 : f32 to vector<1x1xf32>
      %46 = arith.addf %38, %45 : vector<1x1xf32>
      %c0_20 = arith.constant 0 : index
      %c0_21 = arith.constant 0 : index
      %47 = vector.load %arg8[%c0_20, %c0_21] : memref<1x1xf32, #tpu.memory_space<vmem>>, vector<1x1xf32>
      tpu.vector_store %arg8[%c0_20, %c0_21], %46 {strides = array<i32>} : memref<1x1xf32, #tpu.memory_space<vmem>>, vector<1x1xf32>,
    } else {
    }
    %c3_i32 = arith.constant 3 : i32
    %35 = arith.cmpi eq, %arg0, %c3_i32 : i32
    %36 = arith.extui %35 : i1 to i32
    %c0_i32_15 = arith.constant 0 : i32
    %37 = arith.cmpi ne, %36, %c0_i32_15 : i32
    scf.if %37 {
      %c0_16 = arith.constant 0 : index
      %c0_17 = arith.constant 0 : index
      %38 = vector.load %arg8[%c0_16, %c0_17] : memref<1x1xf32, #tpu.memory_space<vmem>>, vector<1x1xf32>
      %cst_18 = arith.constant 0.010416667 : f32
      %39 = vector.broadcast %cst_18 : f32 to vector<1x1xf32>
      %40 = arith.mulf %38, %39 : vector<1x1xf32>
      %c0_19 = arith.constant 0 : index
      %c0_20 = arith.constant 0 : index
      %41 = vector.load %arg4[%c0_19, %c0_20] : memref<1x1xf32, #tpu.memory_space<vmem>>, vector<1x1xf32>
      tpu.vector_store %arg4[%c0_19, %c0_20], %40 {strides = array<i32>} : memref<1x1xf32, #tpu.memory_space<vmem>>, vector<1x1xf32>,
    } else {
    }
    return
  }
  func.func @transform_0(%arg0: i32) -> (i32, i32) {
    %c0_i32 = arith.constant 0 : i32
    %c0_i32_0 = arith.constant 0 : i32
    return %arg0, %c0_i32 : i32, i32
  }
  func.func @transform_1(%arg0: i32) -> (i32, i32) {
    %c0_i32 = arith.constant 0 : i32
    %c0_i32_0 = arith.constant 0 : i32
    %c0_i32_1 = arith.constant 0 : i32
    return %c0_i32, %c0_i32_0 : i32, i32
  }
  func.func @transform_2(%arg0: i32) -> (i32, i32) {
    %c0_i32 = arith.constant 0 : i32
    %c0_i32_0 = arith.constant 0 : i32
    %c0_i32_1 = arith.constant 0 : i32
    return %c0_i32, %c0_i32_0 : i32, i32
  }
  func.func @transform_3(%arg0: i32) -> (i32, i32) {
    %c0_i32 = arith.constant 0 : i32
    %c0_i32_0 = arith.constant 0 : i32
    %c0_i32_1 = arith.constant 0 : i32
    return %c0_i32, %c0_i32_0 : i32, i32
  }
  func.func @transform_4(%arg0: i32) -> (i32, i32) {
    %c0_i32 = arith.constant 0 : i32
    %c0_i32_0 = arith.constant 0 : i32
    %c0_i32_1 = arith.constant 0 : i32
    return %c0_i32, %c0_i32_0 : i32, i32
  }
}

</mosaic_0001>

<llo_original>
// kernel: run.1
$region0: #{run.1}
  #allocation0 [shape = 'u32[]', space=smem, size = 0x4, offset = 0x4, fixed_abs, tag = 'smem constant byte address 0x4 - core index']
  #allocation1 [shape = 'u32[72,128]{1,0:T(1,128)}', space=vmem, size = 0x9000, scoped, tag = 'internal scratch']
  #allocation2 [shape = 'f32[32,128]{1,0:T(8,128)}', space=vmem, size = 0x4000, scoped, tag = 'scratch operand']
  #allocation3 [shape = 'f32[16,128]{1,0:T(8,128)}', space=vmem, size = 0x2000, scoped, tag = 'scratch operand']
  #allocation4 [shape = 'f32[1,1]{1,0:T(1,128)}', space=vmem, size = 0x200, scoped, tag = 'scratch operand']
  %s0 = inlined_call_operand.hbm [shape: bf16[64,128], index: 0, kind: input, shape index: {}]
  %s1 = inlined_call_operand.hbm [shape: bf16[32,128], index: 1, kind: input, shape index: {}]
  %s2 = inlined_call_operand.vmem [shape: f32[1,128], index: 2, kind: input, shape index: {}]
  %s3 = inlined_call_operand.hbm [shape: f32[1,1], index: 3, kind: output, shape index: {0}]
  %s4 = inlined_call_operand.hbm [shape: f32[1,128], index: 4, kind: output, shape index: {1}]
  %5 = xla_tuple %s3, %s4
  %s6 = sld [smem:[#allocation0]]
  $region77: #{run.1} parent=0
    _
  %s8 = ssub.s32 1, %s6
  %s9 = scalar_select 0, %s8, %s6
  $region1: #{run.1} parent=0
    #allocation5 [shape = 'u8[8192]{0}', space=vmem, size = 0x2000, scoped, tag = 'input window, operand 0']
    #allocation6 [shape = 's32[2]{0}', space=sflag, size = 0x8, scoped, tag = 'scoped memory for run.1']
    #allocation7 [shape = 's32[2]{0}', space=sflag, size = 0x8, scoped, tag = 'scoped memory for run.1']
    #allocation8 [shape = 'u8[8192]{0}', space=vmem, size = 0x2000, scoped, tag = 'input window, operand 1, single buffered']
    #allocation9 [shape = 's32[1]{0}', space=sflag, size = 0x4, scoped, tag = 'scoped memory for run.1']
    #allocation10 [shape = 'u8[512]{0}', space=vmem, size = 0x400, scoped, tag = 'output window, operand 0, single buffered']
    #allocation11 [shape = 'u8[512]{0}', space=vmem, size = 0x400, scoped, tag = 'output window, operand 1, single buffered']
    #allocation12 [shape = 's32[1]{0}', space=sflag, size = 0x4, scoped, tag = 'scoped memory for run.1']
    %10 = vsyncpa [#allocation6], 0
    %s11 = scalar_lea.sflag [#allocation6], 1
    %12 = vsyncpa %s11, 0
    %13 = vsyncpa [#allocation9], 0
    %14 = vsyncpa [#allocation7], 0
    %15 = vsyncpa [#allocation12], 0
    loop: start=0, step=1, limit=6
    $region2: #{run.1} parent=1 // loop_pre_header
      _
    $region3: #{run.1} parent=1 // loop_header
      %s17 = sphi 0, %s21
      %p18 = scmp.ge.s32.totalorder %s17, 6
      %s27 = sphi 0, %s29
      %s30 = sphi 0, %s27
      %s31 = sphi 0, %s30
      %s47 = sphi 0, %s31
      %s51 = sphi 0, %s51
      %s53 = sphi 0, %s51
      %s54 = sphi 0, %s53
      %s68 = sphi 0, %s54
      %s72 = sphi 0, %s72
      %s74 = sphi 0, %s72
      %s75 = sphi 0, %s74
      %s89 = sphi 0, %s75
      %s93 = sphi 0, %s93
      %s95 = sphi 0, %s93
      %s96 = sphi 0, %s95
      %s110 = sphi 0, %s96
      %s114 = sphi 0, %s114
      %s116 = sphi 0, %s114
      %s117 = sphi 0, %s116
      %s131 = sphi 0, %s117
    $region4: #{run.1} parent=1 // loop_header_branch
      %20 = sbr.rel (%p18) target = $region8
    $region5: #{run.1} parent=1 // loop_body
      %s22 = ssub.s32 %s17, 1
      %s23 = ssub.s32 %s17, 2
      %s24 = sadd.s32 %s17, 1
      %s25 = ssub.s32 %s17, %s24
      %p26 = scmp.eq.s32.totalorder %s25, 0
      %s28 = sadd.s32 %s27, 1
      %s29 = scalar_select %p26, %s27, %s28
      %p32 = pneg %p26
      %p33 = scmp.eq.s32.totalorder %s17, 3
      %p34 = por %p32, %p33
      %p35 = scmp.ne.s32.totalorder %s27, %s30
      %p36 = scmp.eq.s32.totalorder %s17, 0
      %p37 = por %p35, %p36
      %p38 = scmp.ne.s32.totalorder %s27, %s30
      %p39 = scmp.eq.s32.totalorder %s22, 3
      %p40 = por %p38, %p39
      %p41 = scmp.ne.s32.totalorder %s30, %s31
      %p42 = scmp.eq.s32.totalorder %s22, 0
      %p43 = por %p41, %p42
      %p44 = scmp.ne.s32.totalorder %s30, %s31
      %p45 = scmp.eq.s32.totalorder %s23, 3
      %p46 = por %p44, %p45
      %p48 = scmp.ne.s32.totalorder %s31, %s47
      %p49 = scmp.eq.s32.totalorder %s23, 0
      %p50 = por %p48, %p49
      %s52 = sadd.s32 %s51, 1
      %p55 = scmp.eq.s32.totalorder %s17, 3
      %p56 = scmp.ne.s32.totalorder %s51, %s53
      %p57 = scmp.eq.s32.totalorder %s17, 0
      %p58 = por %p56, %p57
      %p59 = scmp.ne.s32.totalorder %s51, %s53
      %p60 = scmp.eq.s32.totalorder %s22, 3
      %p61 = por %p59, %p60
      %p62 = scmp.ne.s32.totalorder %s53, %s54
      %p63 = scmp.eq.s32.totalorder %s22, 0
      %p64 = por %p62, %p63
      %p65 = scmp.ne.s32.totalorder %s53, %s54
      %p66 = scmp.eq.s32.totalorder %s23, 3
      %p67 = por %p65, %p66
      %p69 = scmp.ne.s32.totalorder %s54, %s68
      %p70 = scmp.eq.s32.totalorder %s23, 0
      %p71 = por %p69, %p70
      %s73 = sadd.s32 %s72, 1
      %p76 = scmp.eq.s32.totalorder %s17, 3
      %p77 = scmp.ne.s32.totalorder %s72, %s74
      %p78 = scmp.eq.s32.totalorder %s17, 0
      %p79 = por %p77, %p78
      %p80 = scmp.ne.s32.totalorder %s72, %s74
      %p81 = scmp.eq.s32.totalorder %s22, 3
      %p82 = por %p80, %p81
      %p83 = scmp.ne.s32.totalorder %s74, %s75
      %p84 = scmp.eq.s32.totalorder %s22, 0
      %p85 = por %p83, %p84
      %p86 = scmp.ne.s32.totalorder %s74, %s75
      %p87 = scmp.eq.s32.totalorder %s23, 3
      %p88 = por %p86, %p87
      %p90 = scmp.ne.s32.totalorder %s75, %s89
      %p91 = scmp.eq.s32.totalorder %s23, 0
      %p92 = por %p90, %p91
      %s94 = sadd.s32 %s93, 1
      %p97 = scmp.eq.s32.totalorder %s17, 3
      %p98 = scmp.ne.s32.totalorder %s93, %s95
      %p99 = scmp.eq.s32.totalorder %s17, 0
      %p100 = por %p98, %p99
      %p101 = scmp.ne.s32.totalorder %s93, %s95
      %p102 = scmp.eq.s32.totalorder %s22, 3
      %p103 = por %p101, %p102
      %p104 = scmp.ne.s32.totalorder %s95, %s96
      %p105 = scmp.eq.s32.totalorder %s22, 0
      %p106 = por %p104, %p105
      %p107 = scmp.ne.s32.totalorder %s95, %s96
      %p108 = scmp.eq.s32.totalorder %s23, 3
      %p109 = por %p107, %p108
      %p111 = scmp.ne.s32.totalorder %s96, %s110
      %p112 = scmp.eq.s32.totalorder %s23, 0
      %p113 = por %p111, %p112
      %s115 = sadd.s32 %s114, 1
      %p118 = scmp.eq.s32.totalorder %s17, 3
      %p119 = scmp.ne.s32.totalorder %s114, %s116
      %p120 = scmp.eq.s32.totalorder %s17, 0
      %p121 = por %p119, %p120
      %p122 = scmp.ne.s32.totalorder %s114, %s116
      %p123 = scmp.eq.s32.totalorder %s22, 3
      %p124 = por %p122, %p123
      %p125 = scmp.ne.s32.totalorder %s116, %s117
      %p126 = scmp.eq.s32.totalorder %s22, 0
      %p127 = por %p125, %p126
      %p128 = scmp.ne.s32.totalorder %s116, %s117
      %p129 = scmp.eq.s32.totalorder %s23, 3
      %p130 = por %p128, %p129
      %p132 = scmp.ne.s32.totalorder %s117, %s131
      %p133 = scmp.eq.s32.totalorder %s23, 0
      %p134 = por %p132, %p133
      %p135 = scmp.le.s32.totalorder 1, %s17
      %p136 = scmp.lt.s32.totalorder %s17, 5
      %p137 = pnand %p135, %p136
      %p138 = pneg %p137
      // Predicated region
      $region9: #{run.1} parent=5 // pred_check
        _
      $region10: #{run.1} parent=5 // pred_check_branch
        %140 = sbr.rel (%p137) target = $region12
      $region11: #{run.1} parent=5 // pred_region
        %s141 = ssub.s32 %s17, 1
        // Predicated region
        $region13: #{run.1} parent=11 // pred_check
          %p142 = pneg %p64
        $region14: #{run.1} parent=11 // pred_check_branch
          %144 = sbr.rel (%p142) target = $region16
        $region15: #{run.1} parent=11 // pred_region
          %146 = vsyncadd [#allocation9], 0
          %s147 = sshll.u32 %s1, 4
          %s148 = int_to_ptr.hbm [resolvable:$true] %s147
          %s149 = sshll.u32 [#allocation8], 4
          %s150 = int_to_ptr.vmem [resolvable:$true] %s149
          %155 = dma.hbm_to_vmem [thread:$0]  %s148, 256, %s150, [#allocation9], 64, 64, 4
        $region16: #{run.1} parent=11 // pred_fallthru
          _
        // Predicated region
        $region17: #{run.1} parent=11 // pred_check
          %p156 = pneg %p85
        $region18: #{run.1} parent=11 // pred_check_branch
          %158 = sbr.rel (%p156) target = $region20
        $region19: #{run.1} parent=11 // pred_region
          _
        $region20: #{run.1} parent=11 // pred_fallthru
          _
      $region12: #{run.1} parent=5 // pred_fallthru
        _
      %p159 = scmp.lt.s32.totalorder %s17, 4
      // Predicated region
      $region21: #{run.1} parent=5 // pred_check
        %p160 = pneg %p159
      $region22: #{run.1} parent=5 // pred_check_branch
        %162 = sbr.rel (%p160) target = $region24
      $region23: #{run.1} parent=5 // pred_region
        // Predicated region
        $region25: #{run.1} parent=23 // pred_check
          %p163 = pneg %p37
        $region26: #{run.1} parent=23 // pred_check_branch
          %165 = sbr.rel (%p163) target = $region28
        $region27: #{run.1} parent=23 // pred_region
          %s166 = sand.u32 %s27, 1
          %s167 = scalar_lea.sflag [#allocation6], %s166
          %s168 = sand.u32 %s27, 1
          %s169 = smul.addr %s168, 8
          %s170 = scalar_lea.vmem [#allocation5], %s169
          %s171 = smul.u32 2, %s17
          %173 = vsyncadd %s167, 0
          %s174 = smul.addr %s171, 4
          %s175 = scalar_lea.hbm %s0, %s174
          %s176 = sshll.u32 %s175, 4
          %s177 = int_to_ptr.hbm [resolvable:$true] %s176
          %s178 = sshll.u32 %s170, 4
          %s179 = int_to_ptr.vmem [resolvable:$true] %s178
          %184 = dma.hbm_to_vmem [thread:$0]  %s177, 128, %s179, %s167, 64, 64, 4
        $region28: #{run.1} parent=23 // pred_fallthru
          _
      $region24: #{run.1} parent=5 // pred_fallthru
        _
      %p185 = scmp.le.s32.totalorder 1, %s17
      %p186 = scmp.lt.s32.totalorder %s17, 5
      %p187 = pnand %p185, %p186
      %p188 = pneg %p187
      // Predicated region
      $region29: #{run.1} parent=5 // pred_check
        _
      $region30: #{run.1} parent=5 // pred_check_branch
        %190 = sbr.rel (%p187) target = $region32
      $region31: #{run.1} parent=5 // pred_region
        %s191 = ssub.s32 %s17, 1
        %s192 = sand.u32 %s30, 1
        %s193 = scalar_lea.sflag [#allocation6], %s192
        %s194 = sand.u32 %s30, 1
        %s195 = smul.addr %s194, 8
        %s196 = scalar_lea.vmem [#allocation5], %s195
        // Predicated region
        $region33: #{run.1} parent=31 // pred_check
          %p197 = pneg %p43
        $region34: #{run.1} parent=31 // pred_check_branch
          %199 = sbr.rel (%p197) target = $region36
        $region35: #{run.1} parent=31 // pred_region
          %201 = dma.done %s193, 128
        $region36: #{run.1} parent=31 // pred_fallthru
          _
        // Predicated region
        $region37: #{run.1} parent=31 // pred_check
          %p202 = pneg %p64
        $region38: #{run.1} parent=31 // pred_check_branch
          %204 = sbr.rel (%p202) target = $region40
        $region39: #{run.1} parent=31 // pred_region
          %206 = dma.done [#allocation9], 256
        $region40: #{run.1} parent=31 // pred_fallthru
          _
        %s207 = sand.u32 %s30, 1
        %s208 = scalar_lea.sflag [#allocation6], %s207
        %s209 = sand.u32 %s30, 1
        %s210 = smul.addr %s209, 8
        %s211 = scalar_lea.vmem [#allocation5], %s210
        %p212 = pneg %p43
        %p213 = pneg %p40
        %p214 = pneg %p64
        %p215 = pneg %p61
        %p216 = pneg %p85
        %p217 = pneg %p82
        %p218 = pneg %p106
        %p219 = pneg %p103
        %p220 = pneg %p127
        %p221 = pneg %p124
        %s222 = smul.u32 2, %s22
        %p223 = scmp.eq.s32.totalorder %s22, 0
        // Predicated region
        $region41: #{run.1} parent=31 // pred_check
          %p224 = pneg %p223
        $region42: #{run.1} parent=31 // pred_check_branch
          %226 = sbr.rel (%p224) target = $region44
        $region43: #{run.1} parent=31 // pred_region
          %v227 = vld [vmem:[#allocation8] sm:$0xf]
          %v228 = vld [vmem:[#allocation8 + $0x4] sm:$0xf]
          %v229 = vld [vmem:[#allocation8 + $0x8] sm:$0xf]
          %v230 = vld [vmem:[#allocation8 + $0xc] sm:$0xf]
          %v231 = vunpack.c.l.bf16 %v227
          %v232 = vunpack.c.l.bf16 %v228
          %v233 = vunpack.c.l.bf16 %v229
          %v234 = vunpack.c.l.bf16 %v230
          %v235 = vld [vmem:[%s2] sm:$0x1]
          %v237 = vperm.slane %v235, 0
          %v239 = vsub.f32 %v231, %v237
          %v240 = vsub.f32 %v232, %v237
          %v241 = vsub.f32 %v233, %v237
          %v242 = vsub.f32 %v234, %v237
          %v243 = vmul.f32 %v239, 18.181818
          %v244 = vmul.f32 %v240, 18.181818
          %v245 = vmul.f32 %v241, 18.181818
          %v246 = vmul.f32 %v242, 18.181818
          %247 = vmax.xlane.f32.xlu0 %v243
          %v248 = vpop.xlane.xlu0 %247
          %249 = vmax.xlane.f32.xlu0 %v244
          %v250 = vpop.xlane.xlu0 %249
          %251 = vmax.xlane.f32.xlu0 %v245
          %v252 = vpop.xlane.xlu0 %251
          %253 = vmax.xlane.f32.xlu0 %v246
          %v254 = vpop.xlane.xlu0 %253
          %v255 = vsub.f32 %v243, %v248
          %v256 = vsub.f32 %v244, %v250
          %v257 = vsub.f32 %v245, %v252
          %v258 = vsub.f32 %v246, %v254
          %v259 = vmul.f32 %v255, 1.442695
          %v260 = vpow.pop %v259
          %v261 = vmul.f32 %v256, 1.442695
          %v262 = vpow.pop %v261
          %v263 = vmul.f32 %v257, 1.442695
          %v264 = vpow.pop %v263
          %v265 = vmul.f32 %v258, 1.442695
          %v266 = vpow.pop %v265
          %267 = vadd.xlane.f32.xlu0 %v260
          %v268 = vpop.xlane.xlu0 %267
          %269 = vadd.xlane.f32.xlu0 %v262
          %v270 = vpop.xlane.xlu0 %269
          %271 = vadd.xlane.f32.xlu0 %v264
          %v272 = vpop.xlane.xlu0 %271
          %273 = vadd.xlane.f32.xlu0 %v266
          %v274 = vpop.xlane.xlu0 %273
          %v275 = vrcp.pop %v268
          %v276 = vrcp.pop %v270
          %v277 = vrcp.pop %v272
          %v278 = vrcp.pop %v274
          %v279 = vmul.f32 %v260, %v275
          %v280 = vmul.f32 %v262, %v276
          %v281 = vmul.f32 %v264, %v277
          %v282 = vmul.f32 %v266, %v278
          %283 = vst [vmem:[#allocation2] sm:$0xff] %v279
          %284 = vst [vmem:[#allocation2 + $0x8] sm:$0xff] %v280
          %285 = vst [vmem:[#allocation2 + $0x10] sm:$0xff] %v281
          %286 = vst [vmem:[#allocation2 + $0x18] sm:$0xff] %v282
          %v287 = vadd.f32 %v279, %v281
          %v288 = vadd.f32 %v280, %v282
          %289 = vst [vmem:[#allocation3] sm:$0xff] %v287
          %290 = vst [vmem:[#allocation3 + $0x8] sm:$0xff] %v288
          %vm291 = vcmask 0
          %292 = vst.msk [vmem:[#allocation4] sm:$0x1] %vm291, 0.0
          %v293 = vadd.f32 %v231, %v232
          %v294 = vadd.f32 %v293, %v233
          %v295 = vadd.f32 %v294, %v234
          %v296 = vrot.slane %v295, 4
          %v297 = vadd.f32 %v295, %v296
          %v298 = vrot.slane %v297, 2
          %v299 = vadd.f32 %v297, %v298
          %v300 = vrot.slane %v299, 1
          %v301 = vadd.f32 %v299, %v300
          %v302 = vmul.f32 %v301, 0.03125
          %v303 = vmul.f32 %v235, 0.9
          %v304 = vmul.f32 %v302, 0.1
          %v305 = vadd.f32 %v303, %v304
          %306 = vst [vmem:[#allocation11] sm:$0x1] %v305
        $region44: #{run.1} parent=31 // pred_fallthru
          _
        %v307 = vld [vmem:[%s196] sm:$0xf]
        %v308 = vld [vmem:[%s196 + $0x4] sm:$0xf]
        %v309 = vunpack.c.l.bf16 %v307
        %v310 = vunpack.c.l.bf16 %v308
        %v311 = vmul.f32 %v309, 10.0
        %v312 = vmul.f32 %v310, 10.0
        %313 = vmax.xlane.f32.xlu0 %v311
        %v314 = vpop.xlane.xlu0 %313
        %315 = vmax.xlane.f32.xlu0 %v312
        %v316 = vpop.xlane.xlu0 %315
        %v317 = vsub.f32 %v311, %v314
        %v318 = vsub.f32 %v312, %v316
        %v319 = vmul.f32 %v317, 1.442695
        %v320 = vpow.pop %v319
        %v321 = vmul.f32 %v318, 1.442695
        %v322 = vpow.pop %v321
        %323 = vadd.xlane.f32.xlu0 %v320
        %v324 = vpop.xlane.xlu0 %323
        %325 = vadd.xlane.f32.xlu0 %v322
        %v326 = vpop.xlane.xlu0 %325
        %v327 = vlog2.pop %v324
        %v328 = vmul.f32 %v327, 0.6931472
        %v329 = vlog2.pop %v326
        %v330 = vmul.f32 %v329, 0.6931472
        %v331 = vsub.f32 %v317, %v328
        %v332 = vsub.f32 %v318, %v330
        %v333 = vld [vmem:[#allocation4] sm:$0x1]
        %v334 = vld [vmem:[#allocation3] sm:$0xff]
        %v335 = vld [vmem:[#allocation3 + $0x8] sm:$0xff]
        %v336 = vmul.f32 %v334, %v331
        %v337 = vmul.f32 %v335, %v332
        %v338 = vadd.f32 %v336, %v337
        %339 = vadd.xlane.f32.xlu0 %v338
        %v340 = vpop.xlane.xlu0 %339
        %v341 = vrot.slane %v340, 4
        %v342 = vadd.f32 %v340, %v341
        %v343 = vrot.slane %v342, 2
        %v344 = vadd.f32 %v342, %v343
        %v345 = vrot.slane %v344, 1
        %v346 = vadd.f32 %v344, %v345
        %s347 = vtos %v346
        %v348 = vstv %s347
        %v349 = vsub.f32 0.0, %v348
        %v350 = vadd.f32 %v333, %v349
        %vm351 = vcmask 0
        %352 = vst.msk [vmem:[#allocation4] sm:$0x1] %vm351, %v350
        // Predicated region
        $region45: #{run.1} parent=31 // pred_check
          %p353 = pneg %p223
        $region46: #{run.1} parent=31 // pred_check_branch
          %355 = sbr.rel (%p353) target = $region48
        $region47: #{run.1} parent=31 // pred_region
          %v356 = vld [vmem:[#allocation4] sm:$0x1]
          %v357 = vld [vmem:[#allocation2] sm:$0xff]
          %v358 = vld [vmem:[#allocation2 + $0x8] sm:$0xff]
          %v359 = vmul.f32 %v357, %v331
          %v360 = vmul.f32 %v358, %v332
          %v361 = vadd.f32 %v359, %v360
          %362 = vadd.xlane.f32.xlu0 %v361
          %v363 = vpop.xlane.xlu0 %362
          %v364 = vrot.slane %v363, 4
          %v365 = vadd.f32 %v363, %v364
          %v366 = vrot.slane %v365, 2
          %v367 = vadd.f32 %v365, %v366
          %v368 = vrot.slane %v367, 1
          %v369 = vadd.f32 %v367, %v368
          %s370 = vtos %v369
          %v371 = vstv %s370
          %v372 = vadd.f32 %v356, %v371
          %373 = vst.msk [vmem:[#allocation4] sm:$0x1] %vm351, %v372
        $region48: #{run.1} parent=31 // pred_fallthru
          _
        %p374 = scmp.eq.s32.totalorder %s22, 1
        // Predicated region
        $region49: #{run.1} parent=31 // pred_check
          %p375 = pneg %p374
        $region50: #{run.1} parent=31 // pred_check_branch
          %377 = sbr.rel (%p375) target = $region52
        $region51: #{run.1} parent=31 // pred_region
          %v378 = vld [vmem:[#allocation4] sm:$0x1]
          %v379 = vld [vmem:[#allocation2 + $0x10] sm:$0xff]
          %v380 = vld [vmem:[#allocation2 + $0x18] sm:$0xff]
          %v381 = vmul.f32 %v379, %v331
          %v382 = vmul.f32 %v380, %v332
          %v383 = vadd.f32 %v381, %v382
          %384 = vadd.xlane.f32.xlu0 %v383
          %v385 = vpop.xlane.xlu0 %384
          %v386 = vrot.slane %v385, 4
          %v387 = vadd.f32 %v385, %v386
          %v388 = vrot.slane %v387, 2
          %v389 = vadd.f32 %v387, %v388
          %v390 = vrot.slane %v389, 1
          %v391 = vadd.f32 %v389, %v390
          %s392 = vtos %v391
          %v393 = vstv %s392
          %v394 = vadd.f32 %v378, %v393
          %395 = vst.msk [vmem:[#allocation4] sm:$0x1] %vm351, %v394
        $region52: #{run.1} parent=31 // pred_fallthru
          _
        %p396 = scmp.eq.s32.totalorder %s22, 3
        // Predicated region
        $region53: #{run.1} parent=31 // pred_check
          %p397 = pneg %p396
        $region54: #{run.1} parent=31 // pred_check_branch
          %399 = sbr.rel (%p397) target = $region56
        $region55: #{run.1} parent=31 // pred_region
          %v400 = vld [vmem:[#allocation4] sm:$0x1]
          %v401 = vmul.f32 %v400, 0.010416667
          %402 = vst.msk [vmem:[#allocation10] sm:$0x1] %vm351, %v401
        $region56: #{run.1} parent=31 // pred_fallthru
          _
        // Predicated region
        $region57: #{run.1} parent=31 // pred_check
          %p403 = pneg %p103
        $region58: #{run.1} parent=31 // pred_check_branch
          %405 = sbr.rel (%p403) target = $region60
        $region59: #{run.1} parent=31 // pred_region
          %407 = vsyncadd [#allocation7], 0
          %s409 = sshll.u32 [#allocation10], 4
          %s410 = int_to_ptr.vmem [resolvable:$true] %s409
          %s411 = sshll.u32 %s3, 4
          %s412 = int_to_ptr.hbm [resolvable:$true] %s411
          %414 = dma.vmem_to_hbm [thread:$0]  %s410, 16, %s412, [#allocation7]
        $region60: #{run.1} parent=31 // pred_fallthru
          _
        // Predicated region
        $region61: #{run.1} parent=31 // pred_check
          %p415 = pneg %p124
        $region62: #{run.1} parent=31 // pred_check_branch
          %417 = sbr.rel (%p415) target = $region64
        $region63: #{run.1} parent=31 // pred_region
          %419 = vsyncadd [#allocation12], 0
          %s421 = sshll.u32 [#allocation11], 4
          %s422 = int_to_ptr.vmem [resolvable:$true] %s421
          %s423 = sshll.u32 %s4, 4
          %s424 = int_to_ptr.hbm [resolvable:$true] %s423
          %426 = dma.vmem_to_hbm [thread:$0]  %s422, 16, %s424, [#allocation12]
        $region64: #{run.1} parent=31 // pred_fallthru
          _
        // Predicated region
        $region65: #{run.1} parent=31 // pred_check
          %p427 = pneg %p103
        $region66: #{run.1} parent=31 // pred_check_branch
          %429 = sbr.rel (%p427) target = $region68
        $region67: #{run.1} parent=31 // pred_region
          %431 = dma.done [#allocation7], 16
        $region68: #{run.1} parent=31 // pred_fallthru
          _
        // Predicated region
        $region69: #{run.1} parent=31 // pred_check
          %p432 = pneg %p124
        $region70: #{run.1} parent=31 // pred_check_branch
          %434 = sbr.rel (%p432) target = $region72
        $region71: #{run.1} parent=31 // pred_region
          %436 = dma.done [#allocation12], 16
        $region72: #{run.1} parent=31 // pred_fallthru
          _
      $region32: #{run.1} parent=5 // pred_fallthru
        _
      %p437 = scmp.le.s32.totalorder 2, %s17
      // Predicated region
      $region73: #{run.1} parent=5 // pred_check
        %p438 = pneg %p437
      $region74: #{run.1} parent=5 // pred_check_branch
        %440 = sbr.rel (%p438) target = $region76
      $region75: #{run.1} parent=5 // pred_region
        %s441 = ssub.s32 %s17, 2
      $region76: #{run.1} parent=5 // pred_fallthru
        _
    $region6: #{run.1} parent=1 // loop_footer
      %s21 = sadd.s32 1, %s17
    $region7: #{run.1} parent=1 // loop_footer_branch
      %16 = sbr.rel target = $region3
    $region8: #{run.1} parent=1 // loop_exit
      _
    %442 = vsyncpa [#allocation6], 1
    %s443 = scalar_lea.sflag [#allocation6], 1
    %444 = vsyncpa %s443, 1
    %445 = vsyncpa [#allocation9], 1
    %446 = vsyncpa [#allocation7], 1
    %s447 = scalar_lea.sflag [#allocation7], 1
    %448 = vsyncpa %s447, 1
    %449 = vsyncpa [#allocation12], 1

</llo_original>
